<compile_context>
chip_gen: v7x
topology: tpu7x:2x2x1
jax: 0.10.0
libtpu: 0.0.40
codegen_flags: <defaults>
</compile_context>

<pallas_src>
import functools

import jax
import jax.numpy as jnp
from jax import lax
from jax.experimental import pallas as pl
from jax.experimental.pallas import tpu as pltpu


def _round_up(v, m):
    return (v + m - 1) // m * m


# --------------------------------------------------------------------------- #
# Pass 1: fused projection + joint online-softmax stats + gd^T accumulation
# --------------------------------------------------------------------------- #
def _pass1_kernel(x_ref, w_ref, b_ref, vm_ref, gd_ref, m_ref, l_ref, *,
                  c_m_pad, c_n_pad, c_n, hw, need_mask, compute_dtype):
    j = pl.program_id(1)

    @pl.when(j == 0)
    def _init():
        m_ref[...] = jnp.full(m_ref.shape, -jnp.inf, m_ref.dtype)
        l_ref[...] = jnp.zeros(l_ref.shape, l_ref.dtype)
        gd_ref[...] = jnp.zeros(gd_ref.shape, gd_ref.dtype)

    x = x_ref[0].astype(compute_dtype)                       # (Cin, t_hw)
    # One fused MXU matmul for [A | Bm | Vm]:  proj = W^T x + b  (f32 accumulate).
    proj = lax.dot_general(w_ref[...], x, (((0,), (0,)), ((), ())),
                           preferred_element_type=jnp.float32) + b_ref[...]
    a = proj[:c_m_pad]                                        # (c_m_pad, t_hw)
    bv = proj[c_m_pad:]                                       # (2*c_n_pad, t_hw)

    if need_mask:                                             # ragged last HW tile
        t_hw = proj.shape[-1]
        col = lax.broadcasted_iota(jnp.int32, (1, t_hw), 1) + j * t_hw
        valid = col < hw
        a = jnp.where(valid, a, 0.0)
        bv = jnp.where(valid, bv, -jnp.inf)

    # Stream raw Vm to HBM for pass 2 (bf16 by default).
    vm_ref[0] = bv[c_n_pad:c_n_pad + c_n].astype(vm_ref.dtype)

    # Joint online-softmax statistics for the [Bm | Vm] rows (one exp per tile).
    m_old = m_ref[0]                                          # (2*c_n_pad, 1)
    m_new = jnp.maximum(m_old, jnp.max(bv, axis=1, keepdims=True))
    alpha = jnp.exp(m_old - m_new)
    e = jnp.exp(bv - m_new)                                   # (2*c_n_pad, t_hw)
    l_ref[0] = alpha * l_ref[0] + jnp.sum(e, axis=1, keepdims=True)
    m_ref[0] = m_new

    # gd^T += exp(Bm - m) @ A^T  (NT dot_general, no materialized transpose).
    e_b = e[:c_n_pad]
    gd_ref[0] = alpha[:c_n_pad] * gd_ref[0] + lax.dot_general(
        e_b.astype(compute_dtype), a.astype(compute_dtype),
        (((1,), (1,)), ((), ())), preferred_element_type=jnp.float32)


# --------------------------------------------------------------------------- #
# Pass 2: out_tile = gdr @ exp(Vm - m_v) + br   (single matmul per HW tile)
# --------------------------------------------------------------------------- #
def _pass2_kernel(vm_ref, gdr_ref, mv_ref, br_ref, o_ref, *, compute_dtype):
    e_v = jnp.exp(vm_ref[0].astype(jnp.float32) - mv_ref[0])   # (c_n, t_hw)
    out = jnp.dot(gdr_ref[0], e_v.astype(compute_dtype),
                  preferred_element_type=jnp.float32) + br_ref[...]
    o_ref[0] = out.astype(o_ref.dtype)


# --------------------------------------------------------------------------- #
# Wrapper
# --------------------------------------------------------------------------- #
def _pick_hw_tile(hw, cin, c_n, c_tot_pad, *, target=2048,
                  tile_budget=20 * 1024 * 1024):
    """Largest HW tile (multiple of 128, or full HW) fitting a conservative VMEM
    budget that covers the double-buffered x/vm/out blocks AND the f32 in-kernel
    intermediates (proj, e). Safe on v7x's 64 MiB VMEM."""
    per_col = 2 * (4 * cin + 2 * c_n) + 8 * c_tot_pad
    max_cols = max(128, tile_budget // per_col)
    t = int(min(hw, target, max_cols))
    if t >= hw:
        return hw
    return max(128, (t // 128) * 128)


def double_attention(x_nchw, wa, ba, wb, bb, wv, bv, wr, br, *,
                     compute_dtype=jnp.bfloat16):
    """x_nchw: (B, Cin, H, W). Returns (B, Cin, H, W), matching the PyTorch module.

    compute_dtype (default bf16) feeds the MXU with bf16 operands; accumulation,
    softmax statistics and the exp/normalization math stay in f32.
    """
    b, c, h, w = x_nchw.shape
    hw = h * w
    c_m = wa.shape[1]
    c_n = wb.shape[1]
    c_m_pad = _round_up(c_m, 8)
    c_n_pad = _round_up(c_n, 8)
    c_tot_pad = c_m_pad + 2 * c_n_pad

    # Fuse + pad the three 1x1 projections so the [A|Bm|Vm] sublane boundaries are
    # 8-aligned (in-kernel slices become free views); pre-cast weights once.
    def pad_cols(m, n_to):
        return jnp.pad(m, ((0, 0), (0, n_to - m.shape[1])))

    w_abv = jnp.concatenate([pad_cols(wa, c_m_pad),
                             pad_cols(wb, c_n_pad),
                             pad_cols(wv, c_n_pad)], axis=1).astype(compute_dtype)
    b_col = jnp.concatenate([pad_cols(ba, c_m_pad),
                             pad_cols(bb, c_n_pad),
                             pad_cols(bv, c_n_pad)],
                            axis=1).reshape(c_tot_pad, 1).astype(jnp.float32)

    # NCHW consumed directly: (B, Cin, H, W) -> (B, Cin, HW) is a free reshape.
    x3 = x_nchw.reshape(b, c, hw)

    t_hw = _pick_hw_tile(hw, c, c_n, c_tot_pad)
    n_hw = pl.cdiv(hw, t_hw)
    need_mask = (hw % t_hw) != 0

    vmem_limit = 40 * 1024 * 1024  # within v7x's 64 MiB physical; ample on v5e/v6e

    # TODO(synk): for B=1 on v7x (2 TensorCores) add a second parallel grid axis
    # (split c_n in pass 1 / split HW in pass 2) so both cores are busy.

    kernel1 = functools.partial(
        _pass1_kernel, c_m_pad=c_m_pad, c_n_pad=c_n_pad, c_n=c_n, hw=hw,
        need_mask=need_mask, compute_dtype=compute_dtype)

    vm, gdT, m_all, l_all = pl.pallas_call(
        kernel1,
        out_shape=(
            jax.ShapeDtypeStruct((b, c_n, hw), compute_dtype),         # raw Vm stream
            jax.ShapeDtypeStruct((b, c_n_pad, c_m_pad), jnp.float32),  # gd^T (unnormalized)
            jax.ShapeDtypeStruct((b, 2 * c_n_pad, 1), jnp.float32),    # max [Bm|Vm]
            jax.ShapeDtypeStruct((b, 2 * c_n_pad, 1), jnp.float32),    # sum [Bm|Vm]
        ),
        grid_spec=pltpu.PrefetchScalarGridSpec(
            num_scalar_prefetch=0,
            grid=(b, n_hw),
            in_specs=[
                pl.BlockSpec((1, c, t_hw), lambda i, j: (i, 0, j)),
                pl.BlockSpec((c, c_tot_pad), lambda i, j: (0, 0)),
                pl.BlockSpec((c_tot_pad, 1), lambda i, j: (0, 0)),
            ],
            out_specs=[
                pl.BlockSpec((1, c_n, t_hw), lambda i, j: (i, 0, j)),
                pl.BlockSpec((1, c_n_pad, c_m_pad), lambda i, j: (i, 0, 0)),
                pl.BlockSpec((1, 2 * c_n_pad, 1), lambda i, j: (i, 0, 0)),
                pl.BlockSpec((1, 2 * c_n_pad, 1), lambda i, j: (i, 0, 0)),
            ],
        ),
        compiler_params=pltpu.CompilerParams(
            dimension_semantics=("parallel", "arbitrary"),
            vmem_limit_bytes=vmem_limit,
        ),
    )(x3, w_abv, b_col)

    # Tiny per-batch epilogue in plain JAX: fold 1/(l_b*l_v) and the reconstruct
    # weight into one (Cin, c_n) operand so pass 2 is a single matmul per tile.
    m_v = m_all[:, c_n_pad:c_n_pad + c_n, :]                   # (B, c_n, 1)
    l_b = l_all[:, :c_n, :]
    l_v = l_all[:, c_n_pad:c_n_pad + c_n, :]
    gdT_real = gdT[:, :c_n, :c_m]                              # (B, c_n, c_m)
    r = 1.0 / (l_b * l_v)                                      # (B, c_n, 1)
    gdr = jnp.einsum('mc,bnm->bcn', wr, gdT_real * r).astype(compute_dtype)
    br_col = br.reshape(c, 1).astype(jnp.float32)

    kernel2 = functools.partial(_pass2_kernel, compute_dtype=compute_dtype)
    out3 = pl.pallas_call(
        kernel2,
        out_shape=jax.ShapeDtypeStruct((b, c, hw), x_nchw.dtype),
        grid_spec=pltpu.PrefetchScalarGridSpec(
            num_scalar_prefetch=0,
            grid=(b, n_hw),
            in_specs=[
                pl.BlockSpec((1, c_n, t_hw), lambda i, j: (i, 0, j)),
                pl.BlockSpec((1, c, c_n), lambda i, j: (i, 0, 0)),
                pl.BlockSpec((1, c_n, 1), lambda i, j: (i, 0, 0)),
                pl.BlockSpec((c, 1), lambda i, j: (0, 0)),
            ],
            out_specs=pl.BlockSpec((1, c, t_hw), lambda i, j: (i, 0, j)),
        ),
        compiler_params=pltpu.CompilerParams(
            dimension_semantics=("parallel", "parallel"),
            vmem_limit_bytes=vmem_limit,
        ),
    )(vm, gdr, m_v, br_col)

    return out3.reshape(b, c, h, w)


# --------------------------------------------------------------------------- #
# Pure-JAX reference (mirrors the PyTorch forward) and parameter init
# --------------------------------------------------------------------------- #
def reference_jax(x_nchw, wa, ba, wb, bb, wv, bv, wr, br):
    b, c, h, w = x_nchw.shape
    hw = h * w
    x = x_nchw.reshape(b, c, hw)                                   # (B, Cin, HW)
    A = jnp.einsum('bch,cm->bmh', x, wa) + ba.reshape(1, -1, 1)    # (B, c_m, HW)
    Bm = jnp.einsum('bch,cn->bnh', x, wb) + bb.reshape(1, -1, 1)   # (B, c_n, HW)
    Vm = jnp.einsum('bch,cn->bnh', x, wv) + bv.reshape(1, -1, 1)   # (B, c_n, HW)
    att_maps = jax.nn.softmax(Bm, axis=2)
    att_vecs = jax.nn.softmax(Vm, axis=2)
    gd = jnp.einsum('bmh,bnh->bmn', A, att_maps)                   # (B, c_m, c_n)
    z = jnp.einsum('bmn,bnh->bmh', gd, att_vecs)                   # (B, c_m, HW)
    out = jnp.einsum('bmh,mc->bch', z, wr) + br.reshape(1, -1, 1)  # (B, Cin, HW)
    return out.reshape(b, c, h, w)


def init_params(key, in_channels, c_m, c_n):
    """kaiming_normal_(mode='fan_out') for 1x1 convs: std = sqrt(2/out_ch); bias 0."""
    k1, k2, k3, k4 = jax.random.split(key, 4)

    def conv_w(k, cin, cout):
        std = jnp.sqrt(2.0 / cout)
        return jax.random.normal(k, (cin, cout), dtype=jnp.float32) * std

    wa = conv_w(k1, in_channels, c_m)
    wb = conv_w(k2, in_channels, c_n)
    wv = conv_w(k3, in_channels, c_n)
    wr = conv_w(k4, c_m, in_channels)
    ba = jnp.zeros((1, c_m), jnp.float32)
    bb = jnp.zeros((1, c_n), jnp.float32)
    bv = jnp.zeros((1, c_n), jnp.float32)
    br = jnp.zeros((1, in_channels), jnp.float32)
    return wa, ba, wb, bb, wv, bv, wr, br


if __name__ == "__main__":
    key = jax.random.PRNGKey(0)
    k_x, k_p = jax.random.split(key)

    B, Cin, H, W = 2, 4, 16, 16
    c_m, c_n = 4, 4

    x = jax.random.normal(k_x, (B, Cin, H, W), dtype=jnp.float32)
    params = init_params(k_p, Cin, c_m, c_n)

    out = jax.block_until_ready(double_attention(x, *params))
    ref = reference_jax(x, *params)

    assert out.shape == (B, Cin, H, W)
    max_err = float(jnp.max(jnp.abs(out - ref)))
    assert jnp.allclose(out, ref, atol=1e-2, rtol=5e-2), (
        f"mismatch vs reference (max abs err {max_err})")

    print("KERNEL_OK")
</pallas_src>

<mosaic_0001>
module attributes {stable_mosaic.version = 11 : i64} {
  func.func @_pass1_kernel(%arg0: i32, %arg1: i32, %arg2: memref<1x4x256xf32, #tpu.memory_space<vmem>>, %arg3: memref<4x24xbf16, #tpu.memory_space<vmem>>, %arg4: memref<24x1xf32, #tpu.memory_space<vmem>>, %arg5: memref<1x4x256xbf16, #tpu.memory_space<vmem>>, %arg6: memref<1x8x8xf32, #tpu.memory_space<vmem>>, %arg7: memref<1x16x1xf32, #tpu.memory_space<vmem>>, %arg8: memref<1x16x1xf32, #tpu.memory_space<vmem>>) attributes {dimension_semantics = [#tpu.dimension_semantics<parallel>, #tpu.dimension_semantics<arbitrary>], iteration_bounds = array<i64: 2, 1>, scalar_prefetch = 0 : i64, scratch_operands = 0 : i64, tpu.core_type = #tpu.core_type<tc>, window_params = [{transform_indices = @transform_0, window_bounds = array<i64: 1, 4, 256>}, {pipeline_mode = #tpu.pipeline_mode<synchronous>, transform_indices = @transform_1, window_bounds = array<i64: 4, 24>}, {pipeline_mode = #tpu.pipeline_mode<synchronous>, transform_indices = @transform_2, window_bounds = array<i64: 24, 1>}, {transform_indices = @transform_3, window_bounds = array<i64: 1, 4, 256>}, {transform_indices = @transform_4, window_bounds = array<i64: 1, 8, 8>}, {transform_indices = @transform_5, window_bounds = array<i64: 1, 16, 1>}, {transform_indices = @transform_6, window_bounds = array<i64: 1, 16, 1>}]} {
    %c0_i32 = arith.constant 0 : i32
    %0 = arith.cmpi eq, %arg1, %c0_i32 : i32
    %1 = arith.extui %0 : i1 to i32
    %c0_i32_0 = arith.constant 0 : i32
    %2 = arith.cmpi ne, %1, %c0_i32_0 : i32
    scf.if %2 {
      %cst_31 = arith.constant 0xFF800000 : f32
      %53 = vector.broadcast %cst_31 : f32 to vector<1x16x1xf32>
      %c0_32 = arith.constant 0 : index
      %c0_33 = arith.constant 0 : index
      %c0_34 = arith.constant 0 : index
      %54 = vector.load %arg7[%c0_32, %c0_33, %c0_34] : memref<1x16x1xf32, #tpu.memory_space<vmem>>, vector<1x16x1xf32>
      tpu.vector_store %arg7[%c0_32, %c0_33, %c0_34], %53 {strides = array<i32>} : memref<1x16x1xf32, #tpu.memory_space<vmem>>, vector<1x16x1xf32>,
      %cst_35 = arith.constant 0.000000e+00 : f32
      %55 = vector.broadcast %cst_35 : f32 to vector<1x16x1xf32>
      %c0_36 = arith.constant 0 : index
      %c0_37 = arith.constant 0 : index
      %c0_38 = arith.constant 0 : index
      %56 = vector.load %arg8[%c0_36, %c0_37, %c0_38] : memref<1x16x1xf32, #tpu.memory_space<vmem>>, vector<1x16x1xf32>
      tpu.vector_store %arg8[%c0_36, %c0_37, %c0_38], %55 {strides = array<i32>} : memref<1x16x1xf32, #tpu.memory_space<vmem>>, vector<1x16x1xf32>,
      %cst_39 = arith.constant 0.000000e+00 : f32
      %57 = vector.broadcast %cst_39 : f32 to vector<1x8x8xf32>
      %c0_40 = arith.constant 0 : index
      %c0_41 = arith.constant 0 : index
      %c0_42 = arith.constant 0 : index
      %58 = vector.load %arg6[%c0_40, %c0_41, %c0_42] : memref<1x8x8xf32, #tpu.memory_space<vmem>>, vector<1x8x8xf32>
      tpu.vector_store %arg6[%c0_40, %c0_41, %c0_42], %57 {strides = array<i32>} : memref<1x8x8xf32, #tpu.memory_space<vmem>>, vector<1x8x8xf32>,
    } else {
    }
    %c0 = arith.constant 0 : index
    %c0_1 = arith.constant 0 : index
    %c0_2 = arith.constant 0 : index
    %3 = vector.load %arg2[%c0, %c0_1, %c0_2] : memref<1x4x256xf32, #tpu.memory_space<vmem>>, vector<1x4x256xf32>
    %4 = vector.shape_cast %3 : vector<1x4x256xf32> to vector<4x256xf32>
    %5 = arith.truncf %4 : vector<4x256xf32> to vector<4x256xbf16>
    %c0_3 = arith.constant 0 : index
    %c0_4 = arith.constant 0 : index
    %6 = vector.load %arg3[%c0_3, %c0_4] : memref<4x24xbf16, #tpu.memory_space<vmem>>, vector<4x24xbf16>
    %cst = arith.constant dense<0.000000e+00> : vector<24x256xf32>
    %7 = tpu.matmul %6, %5, %cst {dimension_numbers = #tpu.dot_dimension_numbers<[0], [0], [1], [1], [0, 1, 1, 1], [], []>} : vector<4x24xbf16>, vector<4x256xbf16>, vector<24x256xf32> -> vector<24x256xf32>
    %c0_5 = arith.constant 0 : index
    %c0_6 = arith.constant 0 : index
    %8 = vector.load %arg4[%c0_5, %c0_6] : memref<24x1xf32, #tpu.memory_space<vmem>>, vector<24x1xf32>
    %9 = vector.broadcast %8 : vector<24x1xf32> to vector<24x256xf32>
    %10 = arith.addf %7, %9 : vector<24x256xf32>
    %11 = vector.extract_strided_slice %10 {offsets = [0, 0], sizes = [8, 256], strides = [1, 1]} : vector<24x256xf32> to vector<8x256xf32>
    %12 = vector.extract_strided_slice %10 {offsets = [8, 0], sizes = [16, 256], strides = [1, 1]} : vector<24x256xf32> to vector<16x256xf32>
    %13 = vector.extract_strided_slice %12 {offsets = [8, 0], sizes = [4, 256], strides = [1, 1]} : vector<16x256xf32> to vector<4x256xf32>
    %14 = arith.truncf %13 : vector<4x256xf32> to vector<4x256xbf16>
    %c0_7 = arith.constant 0 : index
    %c0_8 = arith.constant 0 : index
    %c0_9 = arith.constant 0 : index
    %15 = vector.load %arg5[%c0_7, %c0_8, %c0_9] : memref<1x4x256xbf16, #tpu.memory_space<vmem>>, vector<1x4x256xbf16>
    %16 = vector.shape_cast %15 : vector<1x4x256xbf16> to vector<4x256xbf16>
    %17 = vector.shape_cast %14 : vector<4x256xbf16> to vector<1x4x256xbf16>
    tpu.vector_store %arg5[%c0_7, %c0_8, %c0_9], %17 {strides = array<i32>} : memref<1x4x256xbf16, #tpu.memory_space<vmem>>, vector<1x4x256xbf16>,
    %c0_10 = arith.constant 0 : index
    %c0_11 = arith.constant 0 : index
    %c0_12 = arith.constant 0 : index
    %18 = vector.load %arg7[%c0_10, %c0_11, %c0_12] : memref<1x16x1xf32, #tpu.memory_space<vmem>>, vector<1x16x1xf32>
    %19 = vector.shape_cast %18 : vector<1x16x1xf32> to vector<16x1xf32>
    %cst_13 = arith.constant dense<0xFF800000> : vector<16xf32>
    %20 = vector.multi_reduction <maximumf>, %12, %cst_13 [1] : vector<16x256xf32> to vector<16xf32>
    %21 = vector.shape_cast %20 : vector<16xf32> to vector<16x1xf32>
    %22 = arith.maximumf %19, %21 : vector<16x1xf32>
    %23 = arith.subf %19, %22 : vector<16x1xf32>
    %24 = math.exp %23 : vector<16x1xf32>
    %25 = vector.broadcast %22 : vector<16x1xf32> to vector<16x256xf32>
    %26 = arith.subf %12, %25 : vector<16x256xf32>
    %27 = math.exp %26 : vector<16x256xf32>
    %c0_14 = arith.constant 0 : index
    %c0_15 = arith.constant 0 : index
    %c0_16 = arith.constant 0 : index
    %28 = vector.load %arg8[%c0_14, %c0_15, %c0_16] : memref<1x16x1xf32, #tpu.memory_space<vmem>>, vector<1x16x1xf32>
    %29 = vector.shape_cast %28 : vector<1x16x1xf32> to vector<16x1xf32>
    %30 = arith.mulf %24, %29 : vector<16x1xf32>
    %cst_17 = arith.constant dense<0.000000e+00> : vector<16xf32>
    %31 = vector.multi_reduction <add>, %27, %cst_17 [1] : vector<16x256xf32> to vector<16xf32>
    %32 = vector.shape_cast %31 : vector<16xf32> to vector<16x1xf32>
    %33 = arith.addf %30, %32 : vector<16x1xf32>
    %c0_18 = arith.constant 0 : index
    %c0_19 = arith.constant 0 : index
    %c0_20 = arith.constant 0 : index
    %34 = vector.load %arg8[%c0_18, %c0_19, %c0_20] : memref<1x16x1xf32, #tpu.memory_space<vmem>>, vector<1x16x1xf32>
    %35 = vector.shape_cast %34 : vector<1x16x1xf32> to vector<16x1xf32>
    %36 = vector.shape_cast %33 : vector<16x1xf32> to vector<1x16x1xf32>
    tpu.vector_store %arg8[%c0_18, %c0_19, %c0_20], %36 {strides = array<i32>} : memref<1x16x1xf32, #tpu.memory_space<vmem>>, vector<1x16x1xf32>,
    %c0_21 = arith.constant 0 : index
    %c0_22 = arith.constant 0 : index
    %c0_23 = arith.constant 0 : index
    %37 = vector.load %arg7[%c0_21, %c0_22, %c0_23] : memref<1x16x1xf32, #tpu.memory_space<vmem>>, vector<1x16x1xf32>
    %38 = vector.shape_cast %37 : vector<1x16x1xf32> to vector<16x1xf32>
    %39 = vector.shape_cast %22 : vector<16x1xf32> to vector<1x16x1xf32>
    tpu.vector_store %arg7[%c0_21, %c0_22, %c0_23], %39 {strides = array<i32>} : memref<1x16x1xf32, #tpu.memory_space<vmem>>, vector<1x16x1xf32>,
    %40 = vector.extract_strided_slice %27 {offsets = [0, 0], sizes = [8, 256], strides = [1, 1]} : vector<16x256xf32> to vector<8x256xf32>
    %41 = vector.extract_strided_slice %24 {offsets = [0, 0], sizes = [8, 1], strides = [1, 1]} : vector<16x1xf32> to vector<8x1xf32>
    %c0_24 = arith.constant 0 : index
    %c0_25 = arith.constant 0 : index
    %c0_26 = arith.constant 0 : index
    %42 = vector.load %arg6[%c0_24, %c0_25, %c0_26] : memref<1x8x8xf32, #tpu.memory_space<vmem>>, vector<1x8x8xf32>
    %43 = vector.shape_cast %42 : vector<1x8x8xf32> to vector<8x8xf32>
    %44 = vector.broadcast %41 : vector<8x1xf32> to vector<8x8xf32>
    %45 = arith.mulf %44, %43 : vector<8x8xf32>
    %46 = arith.truncf %40 : vector<8x256xf32> to vector<8x256xbf16>
    %47 = arith.truncf %11 : vector<8x256xf32> to vector<8x256xbf16>
    %cst_27 = arith.constant dense<0.000000e+00> : vector<8x8xf32>
    %48 = tpu.matmul %46, %47, %cst_27 {dimension_numbers = #tpu.dot_dimension_numbers<[1], [1], [0], [0], [0, 0, 1, 0], [], []>} : vector<8x256xbf16>, vector<8x256xbf16>, vector<8x8xf32> -> vector<8x8xf32>
    %49 = arith.addf %45, %48 : vector<8x8xf32>
    %c0_28 = arith.constant 0 : index
    %c0_29 = arith.constant 0 : index
    %c0_30 = arith.constant 0 : index
    %50 = vector.load %arg6[%c0_28, %c0_29, %c0_30] : memref<1x8x8xf32, #tpu.memory_space<vmem>>, vector<1x8x8xf32>
    %51 = vector.shape_cast %50 : vector<1x8x8xf32> to vector<8x8xf32>
    %52 = vector.shape_cast %49 : vector<8x8xf32> to vector<1x8x8xf32>
    tpu.vector_store %arg6[%c0_28, %c0_29, %c0_30], %52 {strides = array<i32>} : memref<1x8x8xf32, #tpu.memory_space<vmem>>, vector<1x8x8xf32>,
    return
  }
  func.func @transform_0(%arg0: i32, %arg1: i32) -> (i32, i32, i32) {
    %c0_i32 = arith.constant 0 : i32
    %c0_i32_0 = arith.constant 0 : i32
    return %arg0, %c0_i32, %arg1 : i32, i32, i32
  }
  func.func @transform_1(%arg0: i32, %arg1: i32) -> (i32, i32) {
    %c0_i32 = arith.constant 0 : i32
    %c0_i32_0 = arith.constant 0 : i32
    %c0_i32_1 = arith.constant 0 : i32
    return %c0_i32, %c0_i32_0 : i32, i32
  }
  func.func @transform_2(%arg0: i32, %arg1: i32) -> (i32, i32) {
    %c0_i32 = arith.constant 0 : i32
    %c0_i32_0 = arith.constant 0 : i32
    %c0_i32_1 = arith.constant 0 : i32
    return %c0_i32, %c0_i32_0 : i32, i32
  }
  func.func @transform_3(%arg0: i32, %arg1: i32) -> (i32, i32, i32) {
    %c0_i32 = arith.constant 0 : i32
    %c0_i32_0 = arith.constant 0 : i32
    return %arg0, %c0_i32, %arg1 : i32, i32, i32
  }
  func.func @transform_4(%arg0: i32, %arg1: i32) -> (i32, i32, i32) {
    %c0_i32 = arith.constant 0 : i32
    %c0_i32_0 = arith.constant 0 : i32
    %c0_i32_1 = arith.constant 0 : i32
    return %arg0, %c0_i32, %c0_i32_0 : i32, i32, i32
  }
  func.func @transform_5(%arg0: i32, %arg1: i32) -> (i32, i32, i32) {
    %c0_i32 = arith.constant 0 : i32
    %c0_i32_0 = arith.constant 0 : i32
    %c0_i32_1 = arith.constant 0 : i32
    return %arg0, %c0_i32, %c0_i32_0 : i32, i32, i32
  }
  func.func @transform_6(%arg0: i32, %arg1: i32) -> (i32, i32, i32) {
    %c0_i32 = arith.constant 0 : i32
    %c0_i32_0 = arith.constant 0 : i32
    %c0_i32_1 = arith.constant 0 : i32
    return %arg0, %c0_i32, %c0_i32_0 : i32, i32, i32
  }
}

</mosaic_0001>

<llo_original>
// kernel: tpu_custom_call.1
$region0: #{tpu_custom_call.1}
  #allocation0 [shape = 'u32[]', space=smem, size = 0x4, offset = 0x4, fixed_abs, tag = 'smem constant byte address 0x4 - core index']
  #allocation1 [shape = 'u32[144,128]{1,0:T(1,128)}', space=vmem, size = 0x12000, scoped, tag = 'internal scratch']
  %s0 = inlined_call_operand.vmem [shape: f32[2,4,256], index: 0, kind: input, shape index: {}]
  %s1 = inlined_call_operand.vmem [shape: bf16[4,24], index: 1, kind: input, shape index: {}]
  %s2 = inlined_call_operand.vmem [shape: f32[24,1], index: 2, kind: input, shape index: {}]
  %s3 = inlined_call_operand.hbm [shape: bf16[2,4,256], index: 3, kind: output, shape index: {0}]
  %s4 = inlined_call_operand.hbm [shape: f32[2,8,8], index: 4, kind: output, shape index: {1}]
  %s5 = inlined_call_operand.vmem [shape: f32[2,16,1], index: 5, kind: output, shape index: {2}]
  %s6 = inlined_call_operand.vmem [shape: f32[2,16,1], index: 6, kind: output, shape index: {3}]
  %7 = xla_tuple %s3, %s4, %s5, %s6
  %s8 = sld [smem:[#allocation0]]
  $region73: #{tpu_custom_call.1} parent=0
    _
  %s10 = ssub.s32 1, %s8
  %s11 = scalar_select 0, %s10, %s8
  $region1: #{tpu_custom_call.1} parent=0
    #allocation2 [shape = 'u8[4096]{0}', space=vmem, size = 0x1000, scoped, tag = 'output window, operand 0']
    #allocation3 [shape = 's32[2]{0}', space=sflag, size = 0x8, scoped, tag = 'scoped memory for tpu_custom_call.1']
    #allocation4 [shape = 'u8[8192]{0}', space=vmem, size = 0x2000, scoped, tag = 'output window, operand 1']
    #allocation5 [shape = 's32[2]{0}', space=sflag, size = 0x8, scoped, tag = 'scoped memory for tpu_custom_call.1']
    %12 = vsyncpa [#allocation3], 0
    %s13 = scalar_lea.sflag [#allocation3], 1
    %14 = vsyncpa %s13, 0
    %15 = vsyncpa [#allocation5], 0
    %s16 = scalar_lea.sflag [#allocation5], 1
    %17 = vsyncpa %s16, 0
    loop: start=0, step=1, limit=4
    $region2: #{tpu_custom_call.1} parent=1 // loop_pre_header
      _
    $region3: #{tpu_custom_call.1} parent=1 // loop_header
      %s19 = sphi 0, %s23
      %p20 = scmp.ge.s32.totalorder %s19, 4
      %s26 = sphi 0, %s38
      %s27 = sphi 0, %s34
      %s28 = sphi 0, %s26
      %s29 = sphi 0, %s27
      %s30 = sphi 0, %s28
      %s31 = sphi 0, %s29
      %s43 = sphi 0, %s45
      %s46 = sphi 0, %s43
      %s47 = sphi 0, %s46
      %s63 = sphi 0, %s47
      %s67 = sphi 0, %s67
      %s69 = sphi 0, %s67
      %s70 = sphi 0, %s69
      %s84 = sphi 0, %s70
      %s88 = sphi 0, %s88
      %s90 = sphi 0, %s88
      %s91 = sphi 0, %s90
      %s105 = sphi 0, %s91
      %s113 = sphi 0, %s115
      %s116 = sphi 0, %s113
      %s117 = sphi 0, %s116
      %s133 = sphi 0, %s117
      %s139 = sphi 0, %s141
      %s142 = sphi 0, %s139
      %s143 = sphi 0, %s142
      %s159 = sphi 0, %s143
      %s165 = sphi 0, %s167
      %s168 = sphi 0, %s165
      %s169 = sphi 0, %s168
      %s185 = sphi 0, %s169
      %s191 = sphi 0, %s193
      %s194 = sphi 0, %s191
      %s195 = sphi 0, %s194
      %s211 = sphi 0, %s195
    $region4: #{tpu_custom_call.1} parent=1 // loop_header_branch
      %22 = sbr.rel (%p20) target = $region8
    $region5: #{tpu_custom_call.1} parent=1 // loop_body
      %s24 = ssub.s32 %s19, 1
      %s25 = ssub.s32 %s19, 2
      %s32 = sadd.s32 1, %s27
      %p33 = scmp.ge.s32.totalorder %s32, 1
      %s34 = scalar_select %p33, 0, %s32
      %s35 = sadd.s32 1, %s26
      %s36 = scalar_select %p33, %s35, %s26
      %p37 = scmp.ge.s32.totalorder %s36, 2
      %s38 = scalar_select %p37, 0, %s36
      %s39 = ssub.s32 %s26, %s38
      %s40 = ssub.s32 %s27, %s34
      %s41 = sor.u32 %s39, %s40
      %p42 = scmp.eq.s32.totalorder %s41, 0
      %s44 = sadd.s32 %s43, 1
      %s45 = scalar_select %p42, %s43, %s44
      %p48 = pneg %p42
      %p49 = scmp.eq.s32.totalorder %s19, 1
      %p50 = por %p48, %p49
      %p51 = scmp.ne.s32.totalorder %s43, %s46
      %p52 = scmp.eq.s32.totalorder %s19, 0
      %p53 = por %p51, %p52
      %p54 = scmp.ne.s32.totalorder %s43, %s46
      %p55 = scmp.eq.s32.totalorder %s24, 1
      %p56 = por %p54, %p55
      %p57 = scmp.ne.s32.totalorder %s46, %s47
      %p58 = scmp.eq.s32.totalorder %s24, 0
      %p59 = por %p57, %p58
      %p60 = scmp.ne.s32.totalorder %s46, %s47
      %p61 = scmp.eq.s32.totalorder %s25, 1
      %p62 = por %p60, %p61
      %p64 = scmp.ne.s32.totalorder %s47, %s63
      %p65 = scmp.eq.s32.totalorder %s25, 0
      %p66 = por %p64, %p65
      %s68 = sadd.s32 %s67, 1
      %p71 = scmp.eq.s32.totalorder %s19, 1
      %p72 = scmp.ne.s32.totalorder %s67, %s69
      %p73 = scmp.eq.s32.totalorder %s19, 0
      %p74 = por %p72, %p73
      %p75 = scmp.ne.s32.totalorder %s67, %s69
      %p76 = scmp.eq.s32.totalorder %s24, 1
      %p77 = por %p75, %p76
      %p78 = scmp.ne.s32.totalorder %s69, %s70
      %p79 = scmp.eq.s32.totalorder %s24, 0
      %p80 = por %p78, %p79
      %p81 = scmp.ne.s32.totalorder %s69, %s70
      %p82 = scmp.eq.s32.totalorder %s25, 1
      %p83 = por %p81, %p82
      %p85 = scmp.ne.s32.totalorder %s70, %s84
      %p86 = scmp.eq.s32.totalorder %s25, 0
      %p87 = por %p85, %p86
      %s89 = sadd.s32 %s88, 1
      %p92 = scmp.eq.s32.totalorder %s19, 1
      %p93 = scmp.ne.s32.totalorder %s88, %s90
      %p94 = scmp.eq.s32.totalorder %s19, 0
      %p95 = por %p93, %p94
      %p96 = scmp.ne.s32.totalorder %s88, %s90
      %p97 = scmp.eq.s32.totalorder %s24, 1
      %p98 = por %p96, %p97
      %p99 = scmp.ne.s32.totalorder %s90, %s91
      %p100 = scmp.eq.s32.totalorder %s24, 0
      %p101 = por %p99, %p100
      %p102 = scmp.ne.s32.totalorder %s90, %s91
      %p103 = scmp.eq.s32.totalorder %s25, 1
      %p104 = por %p102, %p103
      %p106 = scmp.ne.s32.totalorder %s91, %s105
      %p107 = scmp.eq.s32.totalorder %s25, 0
      %p108 = por %p106, %p107
      %s109 = ssub.s32 %s26, %s38
      %s110 = ssub.s32 %s27, %s34
      %s111 = sor.u32 %s109, %s110
      %p112 = scmp.eq.s32.totalorder %s111, 0
      %s114 = sadd.s32 %s113, 1
      %s115 = scalar_select %p112, %s113, %s114
      %p118 = pneg %p112
      %p119 = scmp.eq.s32.totalorder %s19, 1
      %p120 = por %p118, %p119
      %p121 = scmp.ne.s32.totalorder %s113, %s116
      %p122 = scmp.eq.s32.totalorder %s19, 0
      %p123 = por %p121, %p122
      %p124 = scmp.ne.s32.totalorder %s113, %s116
      %p125 = scmp.eq.s32.totalorder %s24, 1
      %p126 = por %p124, %p125
      %p127 = scmp.ne.s32.totalorder %s116, %s117
      %p128 = scmp.eq.s32.totalorder %s24, 0
      %p129 = por %p127, %p128
      %p130 = scmp.ne.s32.totalorder %s116, %s117
      %p131 = scmp.eq.s32.totalorder %s25, 1
      %p132 = por %p130, %p131
      %p134 = scmp.ne.s32.totalorder %s117, %s133
      %p135 = scmp.eq.s32.totalorder %s25, 0
      %p136 = por %p134, %p135
      %s137 = ssub.s32 %s26, %s38
      %p138 = scmp.eq.s32.totalorder %s137, 0
      %s140 = sadd.s32 %s139, 1
      %s141 = scalar_select %p138, %s139, %s140
      %p144 = pneg %p138
      %p145 = scmp.eq.s32.totalorder %s19, 1
      %p146 = por %p144, %p145
      %p147 = scmp.ne.s32.totalorder %s139, %s142
      %p148 = scmp.eq.s32.totalorder %s19, 0
      %p149 = por %p147, %p148
      %p150 = scmp.ne.s32.totalorder %s139, %s142
      %p151 = scmp.eq.s32.totalorder %s24, 1
      %p152 = por %p150, %p151
      %p153 = scmp.ne.s32.totalorder %s142, %s143
      %p154 = scmp.eq.s32.totalorder %s24, 0
      %p155 = por %p153, %p154
      %p156 = scmp.ne.s32.totalorder %s142, %s143
      %p157 = scmp.eq.s32.totalorder %s25, 1
      %p158 = por %p156, %p157
      %p160 = scmp.ne.s32.totalorder %s143, %s159
      %p161 = scmp.eq.s32.totalorder %s25, 0
      %p162 = por %p160, %p161
      %s163 = ssub.s32 %s26, %s38
      %p164 = scmp.eq.s32.totalorder %s163, 0
      %s166 = sadd.s32 %s165, 1
      %s167 = scalar_select %p164, %s165, %s166
      %p170 = pneg %p164
      %p171 = scmp.eq.s32.totalorder %s19, 1
      %p172 = por %p170, %p171
      %p173 = scmp.ne.s32.totalorder %s165, %s168
      %p174 = scmp.eq.s32.totalorder %s19, 0
      %p175 = por %p173, %p174
      %p176 = scmp.ne.s32.totalorder %s165, %s168
      %p177 = scmp.eq.s32.totalorder %s24, 1
      %p178 = por %p176, %p177
      %p179 = scmp.ne.s32.totalorder %s168, %s169
      %p180 = scmp.eq.s32.totalorder %s24, 0
      %p181 = por %p179, %p180
      %p182 = scmp.ne.s32.totalorder %s168, %s169
      %p183 = scmp.eq.s32.totalorder %s25, 1
      %p184 = por %p182, %p183
      %p186 = scmp.ne.s32.totalorder %s169, %s185
      %p187 = scmp.eq.s32.totalorder %s25, 0
      %p188 = por %p186, %p187
      %s189 = ssub.s32 %s26, %s38
      %p190 = scmp.eq.s32.totalorder %s189, 0
      %s192 = sadd.s32 %s191, 1
      %s193 = scalar_select %p190, %s191, %s192
      %p196 = pneg %p190
      %p197 = scmp.eq.s32.totalorder %s19, 1
      %p198 = por %p196, %p197
      %p199 = scmp.ne.s32.totalorder %s191, %s194
      %p200 = scmp.eq.s32.totalorder %s19, 0
      %p201 = por %p199, %p200
      %p202 = scmp.ne.s32.totalorder %s191, %s194
      %p203 = scmp.eq.s32.totalorder %s24, 1
      %p204 = por %p202, %p203
      %p205 = scmp.ne.s32.totalorder %s194, %s195
      %p206 = scmp.eq.s32.totalorder %s24, 0
      %p207 = por %p205, %p206
      %p208 = scmp.ne.s32.totalorder %s194, %s195
      %p209 = scmp.eq.s32.totalorder %s25, 1
      %p210 = por %p208, %p209
      %p212 = scmp.ne.s32.totalorder %s195, %s211
      %p213 = scmp.eq.s32.totalorder %s25, 0
      %p214 = por %p212, %p213
      %p215 = scmp.le.s32.totalorder 1, %s19
      %p216 = scmp.lt.s32.totalorder %s19, 3
      %p217 = pnand %p215, %p216
      %p218 = pneg %p217
      // Predicated region
      $region9: #{tpu_custom_call.1} parent=5 // pred_check
        _
      $region10: #{tpu_custom_call.1} parent=5 // pred_check_branch
        %220 = sbr.rel (%p217) target = $region12
      $region11: #{tpu_custom_call.1} parent=5 // pred_region
        %s221 = ssub.s32 %s19, 1
        // Predicated region
        $region13: #{tpu_custom_call.1} parent=11 // pred_check
          %p222 = pneg %p80
        $region14: #{tpu_custom_call.1} parent=11 // pred_check_branch
          %224 = sbr.rel (%p222) target = $region16
        $region15: #{tpu_custom_call.1} parent=11 // pred_region
          _
        $region16: #{tpu_custom_call.1} parent=11 // pred_fallthru
          _
        // Predicated region
        $region17: #{tpu_custom_call.1} parent=11 // pred_check
          %p225 = pneg %p101
        $region18: #{tpu_custom_call.1} parent=11 // pred_check_branch
          %227 = sbr.rel (%p225) target = $region20
        $region19: #{tpu_custom_call.1} parent=11 // pred_region
          _
        $region20: #{tpu_custom_call.1} parent=11 // pred_fallthru
          _
      $region12: #{tpu_custom_call.1} parent=5 // pred_fallthru
        _
      %p228 = scmp.lt.s32.totalorder %s19, 2
      // Predicated region
      $region21: #{tpu_custom_call.1} parent=5 // pred_check
        %p229 = pneg %p228
      $region22: #{tpu_custom_call.1} parent=5 // pred_check_branch
        %231 = sbr.rel (%p229) target = $region24
      $region23: #{tpu_custom_call.1} parent=5 // pred_region
        // Predicated region
        $region25: #{tpu_custom_call.1} parent=23 // pred_check
          %p232 = pneg %p53
        $region26: #{tpu_custom_call.1} parent=23 // pred_check_branch
          %234 = sbr.rel (%p232) target = $region28
        $region27: #{tpu_custom_call.1} parent=23 // pred_region
          %s235 = smul.u32 2, %s27
          %p236 = scmp.lt.s32.totalorder %s26, 1
          %s237 = scalar_select %p236, %s26, 1
          %p238 = scmp.lt.s32.totalorder %s235, 1
          %s239 = scalar_select %p238, %s235, 1
          %s240 = smul.addr %s237, 2
          %s241 = sadd.s32 %s239, %s240
          %s242 = smul.addr %s241, 4
          %s243 = scalar_lea.vmem %s0, %s242
          %s244 = smul.u32 2, %s27
        $region28: #{tpu_custom_call.1} parent=23 // pred_fallthru
          _
      $region24: #{tpu_custom_call.1} parent=5 // pred_fallthru
        _
      %p245 = scmp.le.s32.totalorder 1, %s19
      %p246 = scmp.lt.s32.totalorder %s19, 3
      %p247 = pnand %p245, %p246
      %p248 = pneg %p247
      // Predicated region
      $region29: #{tpu_custom_call.1} parent=5 // pred_check
        _
      $region30: #{tpu_custom_call.1} parent=5 // pred_check_branch
        %250 = sbr.rel (%p247) target = $region32
      $region31: #{tpu_custom_call.1} parent=5 // pred_region
        %s251 = ssub.s32 %s19, 1
        %s252 = smul.u32 2, %s29
        %p253 = scmp.lt.s32.totalorder %s28, 1
        %s254 = scalar_select %p253, %s28, 1
        %p255 = scmp.lt.s32.totalorder %s252, 1
        %s256 = scalar_select %p255, %s252, 1
        %s257 = smul.addr %s254, 2
        %s258 = sadd.s32 %s256, %s257
        %s259 = smul.addr %s258, 4
        %s260 = scalar_lea.vmem %s0, %s259
        %p261 = pneg %p59
        %p262 = pneg %p56
        %p263 = pneg %p80
        %p264 = pneg %p77
        %p265 = pneg %p101
        %p266 = pneg %p98
        %p267 = pneg %p129
        %p268 = pneg %p126
        %s269 = sand.u32 %s116, 1
        %s270 = scalar_lea.sflag [#allocation3], %s269
        %s271 = sand.u32 %s116, 1
        %s272 = smul.addr %s271, 4
        %s273 = scalar_lea.vmem [#allocation2], %s272
        %p274 = pneg %p155
        %p275 = pneg %p152
        %s276 = sand.u32 %s142, 1
        %s277 = scalar_lea.sflag [#allocation5], %s276
        %s278 = sand.u32 %s142, 1
        %s279 = smul.addr %s278, 8
        %s280 = scalar_lea.vmem [#allocation4], %s279
        %p281 = pneg %p181
        %p282 = pneg %p178
        %p283 = scmp.lt.s32.totalorder %s28, 1
        %s284 = scalar_select %p283, %s28, 1
        %s285 = smul.addr %s284, 2
        %s286 = smul.addr %s285, 8
        %s287 = scalar_lea.vmem %s5, %s286
        %p288 = pneg %p207
        %p289 = pneg %p204
        %p290 = scmp.lt.s32.totalorder %s28, 1
        %s291 = scalar_select %p290, %s28, 1
        %s292 = smul.addr %s291, 2
        %s293 = smul.addr %s292, 8
        %s294 = scalar_lea.vmem %s6, %s293
        %s295 = smul.u32 2, %s29
        %p296 = scmp.lt.s32.totalorder %s28, 1
        %s297 = scalar_select %p296, %s28, 1
        %p298 = scmp.lt.s32.totalorder %s295, 1
        %s299 = scalar_select %p298, %s295, 1
        %s300 = smul.addr %s297, 2
        %s301 = sadd.s32 %s299, %s300
        %s302 = smul.addr %s301, 4
        %s303 = scalar_lea.vmem %s0, %s302
        %s304 = smul.u32 2, %s29
        %s305 = smul.u32 2, %s29
        %p306 = scmp.lt.s32.totalorder %s28, 1
        %s307 = scalar_select %p306, %s28, 1
        %s308 = smul.addr %s307, 2
        %s309 = smul.addr %s308, 8
        %s310 = scalar_lea.vmem %s5, %s309
        %p311 = scmp.lt.s32.totalorder %s28, 1
        %s312 = scalar_select %p311, %s28, 1
        %s313 = smul.addr %s312, 2
        %s314 = smul.addr %s313, 8
        %s315 = scalar_lea.vmem %s6, %s314
        %p317 = scmp.eq.s32.totalorder %s29, 0
        // Predicated region
        $region33: #{tpu_custom_call.1} parent=31 // pred_check
          %p318 = pneg %p317
        $region34: #{tpu_custom_call.1} parent=31 // pred_check_branch
          %320 = sbr.rel (%p318) target = $region36
        $region35: #{tpu_custom_call.1} parent=31 // pred_region
          %vm321 = vcmask 7168
          %322 = vst.msk [vmem:[%s310] sm:$0xff] %vm321, -inf
          %323 = vst.msk [vmem:[%s310 + $0x8] sm:$0xff] %vm321, -inf
          %324 = vst.msk [vmem:[%s315] sm:$0xff] %vm321, 0.0
          %325 = vst.msk [vmem:[%s315 + $0x8] sm:$0xff] %vm321, 0.0
          %vm326 = vcmask 64512
          %327 = vst.msk [vmem:[%s280] sm:$0xff] %vm326, 0.0
        $region36: #{tpu_custom_call.1} parent=31 // pred_fallthru
          _
        %v328 = vld [vmem:[%s303] sm:$0xff]
        %v330 = vcombine.high %v328, %v328
        %v332 = vpack.c.bf16 %v328, %v328
        %v333 = vpack.c.bf16 %v330, %v330
        %v334 = vld [vmem:[%s1] sm:$0x3]
        %v335 = vld [vmem:[%s2] sm:$0xff]
        %v336 = vld [vmem:[%s2 + $0x8] sm:$0xff]
        %v337 = vld [vmem:[%s2 + $0x10] sm:$0xff]
        %339 = vset.pattern.permute.xlu0 0
        %340 = vperm.xlu0 %339, %v335
        %v341 = vpop.permute.xlu0 %340
        %344 = vset.pattern.permute.xlu0 0
        %345 = vperm.xlu0 %344, %v336
        %v346 = vpop.permute.xlu0 %345
        %349 = vset.pattern.permute.xlu0 0
        %350 = vperm.xlu0 %349, %v337
        %v351 = vpop.permute.xlu0 %350
        %353 = vxpose.xlu0.c.b16.start [1/8] %v334, 128
        %354 = vxpose.xlu0.c.b16.cont [2/8] 0, 128
        %355 = vxpose.xlu0.c.b16.cont [3/8] 0, 128
        %356 = vxpose.xlu0.c.b16.cont [4/8] 0, 128
        %357 = vxpose.xlu0.c.b16.cont [5/8] 0, 128
        %358 = vxpose.xlu0.c.b16.cont [6/8] 0, 128
        %359 = vxpose.xlu0.c.b16.cont [7/8] 0, 128
        %360 = vxpose.xlu0.c.b16.end [8/8] 0, 128
        %v361 = vpop.trf.xlu0
        %v362 = vpop.trf.xlu0
        %v363 = vpop.trf.xlu0
        %v364 = vpop.trf.xlu0
        %v365 = vpop.trf.xlu0
        %v366 = vpop.trf.xlu0
        %v367 = vpop.trf.xlu0
        %v368 = vpop.trf.xlu0
        %vm369 = vcmask 31744
        %v371 = vsel %vm369, %v361, 0
        %v374 = vsel %vm369, %v362, 0
        %vm376 = vcmask 1041408
        %v378 = vsel %vm376, %v332, 0
        %v381 = vsel %vm376, %v333, 0
        %383 = vmatprep.subr.bf16.mxu0 %v381
        %384 = vmatpush1.bf16.msra.mxu0 %v378
        %385 = vmatprep.subr.bf16.mxu0 0
        %386 = vmatpush1.bf16.msra.mxu0 0
        %387 = vmatprep.subr.bf16.mxu0 0
        %388 = vmatpush1.bf16.msra.mxu0 0
        %389 = vmatprep.subr.bf16.mxu0 0
        %390 = vmatpush1.bf16.msra.mxu0 0
        %391 = vmatprep.subr.bf16.mxu0 0
        %392 = vmatpush1.bf16.msra.mxu0 0
        %393 = vmatprep.subr.bf16.mxu0 0
        %394 = vmatpush1.bf16.msra.mxu0 0
        %395 = vmatprep.subr.bf16.mxu0 0
        %396 = vmatpush1.bf16.msra.mxu0 0
        %397 = vmatprep.subr.bf16.mxu0 0
        %398 = vmatpush1.bf16.msra.mxu0 0
        %399 = vmatprep.subr.bf16.mxu0 0
        %400 = vmatpush1.bf16.msra.mxu0 0
        %401 = vmatprep.subr.bf16.mxu0 0
        %402 = vmatpush1.bf16.msra.mxu0 0
        %403 = vmatprep.subr.bf16.mxu0 0
        %404 = vmatpush1.bf16.msra.mxu0 0
        %405 = vmatprep.subr.bf16.mxu0 0
        %406 = vmatpush1.bf16.msra.mxu0 0
        %407 = vmatprep.subr.bf16.mxu0 0
        %408 = vmatpush1.bf16.msra.mxu0 0
        %409 = vmatprep.subr.bf16.mxu0 0
        %410 = vmatpush1.bf16.msra.mxu0 0
        %411 = vmatprep.subr.bf16.mxu0 0
        %412 = vmatpush1.bf16.msra.mxu0 0
        %413 = vmatprep.subr.bf16.mxu0 0
        %414 = vmatpush1.bf16.msra.mxu0 0
        %415 = vmatprep.mubr.bf16.mxu0 0
        %416 = vmatmul.mubr.bf16.gmra.mrb[0].mxu0 %v371
        %v417 = vpop.f32.mrb[0].mxu0
        %v418 = vadd.f32 %v341, %v417
        %v419 = vpop.f32.mrb[0].mxu0
        %v420 = vadd.f32 %v341, %v419
        %v421 = vpop.f32.mrb[0].mxu0
        %v422 = vadd.f32 %v346, %v421
        %v423 = vpop.f32.mrb[0].mxu0
        %v424 = vadd.f32 %v346, %v423
        %425 = vmatprep.mubr.bf16.mxu0 0
        %426 = vmatmul.mubr.bf16.gmra.mrb[0].mxu0 %v374
        %v427 = vpop.f32.mrb[0].mxu0
        %v428 = vadd.f32 %v351, %v427
        %v429 = vpop.f32.mrb[0].mxu0
        %v430 = vadd.f32 %v351, %v429
        %v431 = vpop.f32.mrb[0].mxu0
        %v432 = vpop.f32.mrb[0].mxu0
        %433 = vdwg.mxu0
        %v434 = vpack.c.bf16 %v428, %v428
        %v435 = vpack.c.bf16 %v430, %v430
        %v438 = vcombine.low %v434, %v435
        %v440 = vunpack.c.l.s4 1983009808
        %v441 = vunpack.c.0.s8 %v440
        %v442 = vlaneseq
        %v443 = vshrl.u32 %v442, 7
        %v444 = vsub.s32 %v441, %v443
        %v445 = vrot.slane %v438, %v444
        %447 = vst [vmem:[%s273] sm:$0xf] %v445
        %v448 = vld [vmem:[%s310] sm:$0xff]
        %v449 = vld [vmem:[%s310 + $0x8] sm:$0xff]
        %v450 = vmax.f32 %v422, %v424
        %451 = vmax.xlane.f32.xlu0 %v450
        %v452 = vpop.xlane.xlu0 %451
        %v453 = vmax.f32 %v428, %v430
        %454 = vmax.xlane.f32.xlu0 %v453
        %v455 = vpop.xlane.xlu0 %454
        %v456 = vmax.f32 %v448, %v452
        %v457 = vmax.f32 %v449, %v455
        %v458 = vsub.f32 %v448, %v456
        %v459 = vsub.f32 %v449, %v457
        %v460 = vmul.f32 %v458, 1.442695
        %v461 = vpow.pop %v460
        %v462 = vmul.f32 %v459, 1.442695
        %v463 = vpow.pop %v462
        %465 = vset.pattern.permute.xlu0 0
        %466 = vperm.xlu0 %465, %v456
        %v467 = vpop.permute.xlu0 %466
        %470 = vset.pattern.permute.xlu0 0
        %471 = vperm.xlu0 %470, %v457
        %v472 = vpop.permute.xlu0 %471
        %v474 = vsub.f32 %v422, %v467
        %v475 = vsub.f32 %v424, %v467
        %v476 = vsub.f32 %v428, %v472
        %v477 = vsub.f32 %v430, %v472
        %v478 = vmul.f32 %v474, 1.442695
        %v479 = vpow.pop %v478
        %v480 = vmul.f32 %v475, 1.442695
        %v481 = vpow.pop %v480
        %v482 = vmul.f32 %v476, 1.442695
        %v483 = vpow.pop %v482
        %v484 = vmul.f32 %v477, 1.442695
        %v485 = vpow.pop %v484
        %v486 = vld [vmem:[%s315] sm:$0xff]
        %v487 = vld [vmem:[%s315 + $0x8] sm:$0xff]
        %v488 = vmul.f32 %v461, %v486
        %v489 = vmul.f32 %v463, %v487
        %v490 = vadd.f32 %v479, %v481
        %491 = vadd.xlane.f32.xlu0 %v490
        %v492 = vpop.xlane.xlu0 %491
        %v493 = vadd.f32 %v483, %v485
        %494 = vadd.xlane.f32.xlu0 %v493
        %v495 = vpop.xlane.xlu0 %494
        %v496 = vadd.f32 %v488, %v492
        %v497 = vadd.f32 %v489, %v495
        %vm498 = vcmask 7168
        %499 = vst.msk [vmem:[%s315] sm:$0xff] %vm498, %v496
        %500 = vst.msk [vmem:[%s315 + $0x8] sm:$0xff] %vm498, %v497
        %501 = vst.msk [vmem:[%s310] sm:$0xff] %vm498, %v456
        %502 = vst.msk [vmem:[%s310 + $0x8] sm:$0xff] %vm498, %v457
        %v503 = vld [vmem:[%s280] sm:$0xff]
        %505 = vset.pattern.permute.xlu0 0
        %506 = vperm.xlu0 %505, %v461
        %v507 = vpop.permute.xlu0 %506
        %v509 = vmul.f32 %v507, %v503
        %v510 = vpack.c.bf16 %v479, %v479
        %v511 = vpack.c.bf16 %v481, %v481
        %v512 = vpack.c.bf16 %v418, %v418
        %v513 = vpack.c.bf16 %v420, %v420
        %514 = vmatprep.subr.bf16.mxu0 %v513
        %515 = vmatpush1.bf16.xpose.msra.mxu0 %v512
        %516 = vmatprep.subr.bf16.mxu0 0
        %517 = vmatpush1.bf16.xpose.msra.mxu0 0
        %518 = vmatprep.subr.bf16.mxu0 0
        %519 = vmatpush1.bf16.xpose.msra.mxu0 0
        %520 = vmatprep.subr.bf16.mxu0 0
        %521 = vmatpush1.bf16.xpose.msra.mxu0 0
        %522 = vmatprep.subr.bf16.mxu0 0
        %523 = vmatpush1.bf16.xpose.msra.mxu0 0
        %524 = vmatprep.subr.bf16.mxu0 0
        %525 = vmatpush1.bf16.xpose.msra.mxu0 0
        %526 = vmatprep.subr.bf16.mxu0 0
        %527 = vmatpush1.bf16.xpose.msra.mxu0 0
        %528 = vmatprep.subr.bf16.mxu0 0
        %529 = vmatpush1.bf16.xpose.msra.mxu0 0
        %530 = vmatprep.subr.bf16.mxu0 0
        %531 = vmatpush1.bf16.xpose.msra.mxu0 0
        %532 = vmatprep.subr.bf16.mxu0 0
        %533 = vmatpush1.bf16.xpose.msra.mxu0 0
        %534 = vmatprep.subr.bf16.mxu0 0
        %535 = vmatpush1.bf16.xpose.msra.mxu0 0
        %536 = vmatprep.subr.bf16.mxu0 0
        %537 = vmatpush1.bf16.xpose.msra.mxu0 0
        %538 = vmatprep.subr.bf16.mxu0 0
        %539 = vmatpush1.bf16.xpose.msra.mxu0 0
        %540 = vmatprep.subr.bf16.mxu0 0
        %541 = vmatpush1.bf16.xpose.msra.mxu0 0
        %542 = vmatprep.subr.bf16.mxu0 0
        %543 = vmatpush1.bf16.xpose.msra.mxu0 0
        %544 = vmatprep.subr.bf16.mxu0 0
        %545 = vmatpush1.bf16.xpose.msra.mxu0 0
        %546 = vmatprep.mubr.bf16.mxu0 %v511
        %547 = vmatmul.mubr.bf16.gmra.mrb[0].mxu0 %v510
        %v548 = vpop.f32.mrb[0].mxu0
        %v549 = vadd.f32 0.0, %v548
        %v550 = vpop.f32.mrb[0].mxu0
        %v551 = vpop.f32.mrb[0].mxu0
        %v552 = vpop.f32.mrb[0].mxu0
        %553 = vdwg.mxu0
        %v554 = vadd.f32 %v509, %v549
        %vm555 = vcmask 64512
        %556 = vst.msk [vmem:[%s280] sm:$0xff] %vm555, %v554
        %s557 = sand.u32 %s116, 1
        %s558 = scalar_lea.sflag [#allocation3], %s557
        %s559 = sand.u32 %s116, 1
        %s560 = smul.addr %s559, 4
        %s561 = scalar_lea.vmem [#allocation2], %s560
        %s562 = sand.u32 %s142, 1
        %s563 = scalar_lea.sflag [#allocation5], %s562
        %s564 = sand.u32 %s142, 1
        %s565 = smul.addr %s564, 8
        %s566 = scalar_lea.vmem [#allocation4], %s565
        %p567 = scmp.lt.s32.totalorder %s28, 1
        %s568 = scalar_select %p567, %s28, 1
        %s569 = smul.addr %s568, 2
        %s570 = smul.addr %s569, 8
        %s571 = scalar_lea.vmem %s5, %s570
        %p572 = scmp.lt.s32.totalorder %s28, 1
        %s573 = scalar_select %p572, %s28, 1
        %s574 = smul.addr %s573, 2
        %s575 = smul.addr %s574, 8
        %s576 = scalar_lea.vmem %s6, %s575
        // Predicated region
        $region37: #{tpu_custom_call.1} parent=31 // pred_check
          %p577 = pneg %p126
        $region38: #{tpu_custom_call.1} parent=31 // pred_check_branch
          %579 = sbr.rel (%p577) target = $region40
        $region39: #{tpu_custom_call.1} parent=31 // pred_region
          %s580 = smul.u32 2, %s29
          %s582 = ssub.s32 64, 64
          %583 = vsyncadd %s558, %s582
          %s584 = smul.addr %s28, 2
          %s585 = sadd.s32 %s580, %s584
          %s586 = smul.addr %s585, 32
          %s587 = scalar_lea.hbm %s3, %s586
          %s589 = sshll.u32 %s561, 4
          %s590 = int_to_ptr.vmem [resolvable:$true] %s589
          %592 = dma.vmem_to_hbm [thread:$0]  %s590, 64, %s587, %s558
        $region40: #{tpu_custom_call.1} parent=31 // pred_fallthru
          _
        // Predicated region
        $region41: #{tpu_custom_call.1} parent=31 // pred_check
          %p593 = pneg %p152
        $region42: #{tpu_custom_call.1} parent=31 // pred_check_branch
          %595 = sbr.rel (%p593) target = $region44
        $region43: #{tpu_custom_call.1} parent=31 // pred_region
          %s597 = ssub.s32 128, 128
          %598 = vsyncadd %s563, %s597
          %s599 = smul.addr %s28, 128
          %s600 = scalar_lea.hbm %s4, %s599
          %s602 = sshll.u32 %s566, 4
          %s603 = int_to_ptr.vmem [resolvable:$true] %s602
          %605 = dma.vmem_to_hbm [thread:$0]  %s603, 128, %s600, %s563
        $region44: #{tpu_custom_call.1} parent=31 // pred_fallthru
          _
        // Predicated region
        $region45: #{tpu_custom_call.1} parent=31 // pred_check
          %p606 = pneg %p178
        $region46: #{tpu_custom_call.1} parent=31 // pred_check_branch
          %608 = sbr.rel (%p606) target = $region48
        $region47: #{tpu_custom_call.1} parent=31 // pred_region
          _
        $region48: #{tpu_custom_call.1} parent=31 // pred_fallthru
          _
        // Predicated region
        $region49: #{tpu_custom_call.1} parent=31 // pred_check
          %p609 = pneg %p204
        $region50: #{tpu_custom_call.1} parent=31 // pred_check_branch
          %611 = sbr.rel (%p609) target = $region52
        $region51: #{tpu_custom_call.1} parent=31 // pred_region
          _
        $region52: #{tpu_custom_call.1} parent=31 // pred_fallthru
          _
      $region32: #{tpu_custom_call.1} parent=5 // pred_fallthru
        _
      %p612 = scmp.le.s32.totalorder 2, %s19
      // Predicated region
      $region53: #{tpu_custom_call.1} parent=5 // pred_check
        %p613 = pneg %p612
      $region54: #{tpu_custom_call.1} parent=5 // pred_check_branch
        %615 = sbr.rel (%p613) target = $region56
      $region55: #{tpu_custom_call.1} parent=5 // pred_region
        %s616 = ssub.s32 %s19, 2
        // Predicated region
        $region57: #{tpu_custom_call.1} parent=55 // pred_check
          %p617 = pneg %p132
        $region58: #{tpu_custom_call.1} parent=55 // pred_check_branch
          %619 = sbr.rel (%p617) target = $region60
        $region59: #{tpu_custom_call.1} parent=55 // pred_region
          %s620 = sand.u32 %s117, 1
          %s621 = scalar_lea.sflag [#allocation3], %s620
          %s622 = sand.u32 %s117, 1
          %s623 = smul.addr %s622, 4
          %s624 = scalar_lea.vmem [#allocation2], %s623
          %625 = dma.done %s621, 64
        $region60: #{tpu_custom_call.1} parent=55 // pred_fallthru
          _
        // Predicated region
        $region61: #{tpu_custom_call.1} parent=55 // pred_check
          %p626 = pneg %p158
        $region62: #{tpu_custom_call.1} parent=55 // pred_check_branch
          %628 = sbr.rel (%p626) target = $region64
        $region63: #{tpu_custom_call.1} parent=55 // pred_region
          %s629 = sand.u32 %s143, 1
          %s630 = scalar_lea.sflag [#allocation5], %s629
          %s631 = sand.u32 %s143, 1
          %s632 = smul.addr %s631, 8
          %s633 = scalar_lea.vmem [#allocation4], %s632
          %634 = dma.done %s630, 128
        $region64: #{tpu_custom_call.1} parent=55 // pred_fallthru
          _
        // Predicated region
        $region65: #{tpu_custom_call.1} parent=55 // pred_check
          %p635 = pneg %p184
        $region66: #{tpu_custom_call.1} parent=55 // pred_check_branch
          %637 = sbr.rel (%p635) target = $region68
        $region67: #{tpu_custom_call.1} parent=55 // pred_region
          %p638 = scmp.lt.s32.totalorder %s30, 1
          %s639 = scalar_select %p638, %s30, 1
          %s640 = smul.addr %s639, 2
          %s641 = smul.addr %s640, 8
          %s642 = scalar_lea.vmem %s5, %s641
        $region68: #{tpu_custom_call.1} parent=55 // pred_fallthru
          _
        // Predicated region
        $region69: #{tpu_custom_call.1} parent=55 // pred_check
          %p643 = pneg %p210
        $region70: #{tpu_custom_call.1} parent=55 // pred_check_branch
          %645 = sbr.rel (%p643) target = $region72
        $region71: #{tpu_custom_call.1} parent=55 // pred_region
          %p646 = scmp.lt.s32.totalorder %s30, 1
          %s647 = scalar_select %p646, %s30, 1
          %s648 = smul.addr %s647, 2
          %s649 = smul.addr %s648, 8
          %s650 = scalar_lea.vmem %s6, %s649
        $region72: #{tpu_custom_call.1} parent=55 // pred_fallthru
          _
      $region56: #{tpu_custom_call.1} parent=5 // pred_fallthru
        _
    $region6: #{tpu_custom_call.1} parent=1 // loop_footer
      %s23 = sadd.s32 1, %s19
    $region7: #{tpu_custom_call.1} parent=1 // loop_footer_branch
      %18 = sbr.rel target = $region3
    $region8: #{tpu_custom_call.1} parent=1 // loop_exit
      _
    %651 = vsyncpa [#allocation3], 1
    %s652 = scalar_lea.sflag [#allocation3], 1
    %653 = vsyncpa %s652, 1
    %654 = vsyncpa [#allocation5], 1
    %s655 = scalar_lea.sflag [#allocation5], 1
    %656 = vsyncpa %s655, 1

</llo_original>
